<compile_context>
chip_gen: v7x
topology: tpu7x:2x2x1
jax: 0.10.0
libtpu: 0.0.40
codegen_flags: <defaults>
</compile_context>

<pallas_src>
import jax
import jax.numpy as jnp
from jax.experimental import pallas as pl
from jax.experimental.pallas import tpu as pltpu

NUM_CLASSES = 5
LANE = 128  # lane-padded class dimension


def _round_up(n, m):
    return ((n + m - 1) // m) * m


# ---------------------------------------------------------------------------
# Kernels
# ---------------------------------------------------------------------------

def _forward_kernel(x_ref, w1t_ref, b1_ref, w2t_ref, b2_ref, out_ref):
    """One batch tile: logits = (x @ W1t + b1) @ W2t + b2 (bf16 MXU, f32 accumulate)."""
    xb = x_ref[...].astype(w1t_ref.dtype)                      # f32 -> bf16 cast in-kernel
    h = jnp.dot(xb, w1t_ref[...], preferred_element_type=jnp.float32) + b1_ref[...]
    logits = jnp.dot(h.astype(w2t_ref.dtype), w2t_ref[...],
                     preferred_element_type=jnp.float32) + b2_ref[...]
    out_ref[...] = logits.astype(out_ref.dtype)


def _make_loss_kernel(true_batch, tile_rows):
    """Loss kernel closed over the true (unpadded) batch size and the batch tile size."""

    def _loss_kernel(x_ref, w1t_ref, b1_ref, w2t_ref, b2_ref, y_ref, loss_ref):
        step = pl.program_id(0)

        xb = x_ref[...].astype(w1t_ref.dtype)
        h = jnp.dot(xb, w1t_ref[...], preferred_element_type=jnp.float32) + b1_ref[...]
        logits = jnp.dot(h.astype(w2t_ref.dtype), w2t_ref[...],
                         preferred_element_type=jnp.float32) + b2_ref[...]
        # b2's padded columns are -1e30 (and W2t's padded columns are zero), so the lane
        # padding is already excluded from max / logsumexp -- no extra masking needed.

        m = jnp.max(logits, axis=-1, keepdims=True)
        lse = m + jnp.log(jnp.sum(jnp.exp(logits - m), axis=-1, keepdims=True))
        logp = logits - lse

        # One-hot label pick per row, with batch-padding rows masked out.
        col = jax.lax.broadcasted_iota(jnp.int32, logits.shape, 1)
        row = jax.lax.broadcasted_iota(jnp.int32, logits.shape, 0) + step * tile_rows
        pick = (col == y_ref[...]) & (row < true_batch)         # y_ref: (tile, 1) int32

        # Per-tile partial sum (no cross-tile accumulation); wrapper reduces & divides.
        loss_ref[step, 0] = jnp.sum(jnp.where(pick, -logp, 0.0))

    return _loss_kernel


# ---------------------------------------------------------------------------
# Wrapper helpers
# ---------------------------------------------------------------------------

def _prep_operands(params, compute_dtype):
    """PyTorch-layout params -> kernel operands (pre-transposed, lane-padded)."""
    w1, b1, w2, b2 = params
    d = w1.shape[1]
    w1t = w1.T.astype(compute_dtype)                                              # (in, in)
    w2t = jnp.zeros((d, LANE), compute_dtype).at[:, :NUM_CLASSES].set(
        w2.T.astype(compute_dtype))                                               # (in, 128)
    b1r = b1.reshape(1, d).astype(jnp.float32)                                    # (1, in)
    # Padded class columns get -1e30 so padded logits == -1e30 for free on the MXU,
    # which masks them out of the softmax in the loss kernel.  The forward wrapper
    # slices them away, so the same operand serves both paths.
    b2r = jnp.full((1, LANE), -1e30, jnp.float32).at[0, :NUM_CLASSES].set(
        b2.astype(jnp.float32))                                                   # (1, 128)
    return w1t, b1r, w2t, b2r


def _make_weight_specs(d):
    """Constant-index, VMEM-resident weight specs; single-buffered when supported."""
    shapes = [(d, d), (1, d), (d, LANE), (1, LANE)]
    try:
        mode = pl.Buffered(1)
        specs = [pl.BlockSpec(s, lambda i: (0, 0), pipeline_mode=mode) for s in shapes]
        return specs, True
    except Exception:  # pipeline_mode / Buffered(1) unavailable -> default double-buffer
        return [pl.BlockSpec(s, lambda i: (0, 0)) for s in shapes], False


def _choose_batch_tile(batch, max_tile):
    """Multiple-of-16 batch tile; avoid >12.5% full-tile padding waste for large batches."""
    b16 = _round_up(batch, 16)
    if b16 <= max_tile:
        return b16
    candidates = list(range(max_tile, 127, -128)) or [max_tile]
    for t in candidates:  # largest tile with acceptable padding waste
        if (_round_up(b16, t) - b16) * 8 <= b16:
            return t
    return min(candidates, key=lambda t: _round_up(b16, t))


def _vmem_limit_bytes(d, tile, weights_single_buffered, compute_itemsize):
    w_buf = 1 if weights_single_buffered else 2
    weights = w_buf * (compute_itemsize * d * (d + LANE) + 4 * (d + LANE))
    # f32 x tile + (f32-lane-padded) logits/label tiles, double-buffered, plus headroom.
    act = 2 * tile * d * 4 + 2 * tile * LANE * 4
    limit = int((weights + act) * 1.25) + (4 << 20)
    return max(32 << 20, min(limit, 112 << 20))


# ---------------------------------------------------------------------------
# Public entry point
# ---------------------------------------------------------------------------

def torch_model_forward(x, params, y=None, *, compute_dtype=jnp.bfloat16, max_batch_tile=512):
    """Mirrors TorchModel.forward: (batch, 5) logits if y is None, else scalar mean CE loss."""
    w1t, b1r, w2t, b2r = _prep_operands(params, compute_dtype)
    batch, d = x.shape

    tile = _choose_batch_tile(batch, _round_up(max_batch_tile, 16))
    padded_batch = _round_up(batch, tile)
    num_tiles = padded_batch // tile
    grid = (num_tiles,)

    xf = x.astype(jnp.float32)
    if padded_batch != batch:
        xf = jnp.pad(xf, ((0, padded_batch - batch), (0, 0)))

    weight_specs, single_buffered = _make_weight_specs(d)
    x_spec = pl.BlockSpec((tile, d), lambda i: (i, 0))
    vmem_limit = _vmem_limit_bytes(d, tile, single_buffered,
                                   jnp.dtype(compute_dtype).itemsize)

    if y is None:
        out = pl.pallas_call(
            _forward_kernel,
            out_shape=jax.ShapeDtypeStruct((padded_batch, LANE), compute_dtype),
            grid=grid,
            in_specs=[x_spec] + weight_specs,
            out_specs=pl.BlockSpec((tile, LANE), lambda i: (i, 0)),
            compiler_params=pltpu.CompilerParams(
                dimension_semantics=("parallel",),
                vmem_limit_bytes=vmem_limit),
        )(xf, w1t, b1r, w2t, b2r)
        # PyTorch semantics return f32 logits; slice the lane/batch padding away.
        return out[:batch, :NUM_CLASSES].astype(jnp.float32)

    y_pad = jnp.pad(y.astype(jnp.int32), (0, padded_batch - batch)).reshape(padded_batch, 1)
    partials = pl.pallas_call(
        _make_loss_kernel(batch, tile),
        out_shape=jax.ShapeDtypeStruct((num_tiles, 1), jnp.float32),
        grid=grid,
        in_specs=[x_spec] + weight_specs + [pl.BlockSpec((tile, 1), lambda i: (i, 0))],
        out_specs=pl.BlockSpec(memory_space=pltpu.MemorySpace.SMEM),  # per-tile partial sums
        compiler_params=pltpu.CompilerParams(
            dimension_semantics=("arbitrary",),
            vmem_limit_bytes=vmem_limit),
    )(xf, w1t, b1r, w2t, b2r, y_pad)
    return jnp.sum(partials[:, 0]) / jnp.float32(batch)


def init_params(key, input_size):
    """PyTorch nn.Linear layout: W (out, in), b (out,), init U(-1/sqrt(fan_in), 1/sqrt(fan_in))."""
    k1, k2, k3, k4 = jax.random.split(key, 4)
    bound = 1.0 / jnp.sqrt(jnp.float32(input_size))
    w1 = jax.random.uniform(k1, (input_size, input_size), jnp.float32, -bound, bound)
    b1 = jax.random.uniform(k2, (input_size,), jnp.float32, -bound, bound)
    w2 = jax.random.uniform(k3, (NUM_CLASSES, input_size), jnp.float32, -bound, bound)
    b2 = jax.random.uniform(k4, (NUM_CLASSES,), jnp.float32, -bound, bound)
    return w1, b1, w2, b2


if __name__ == "__main__":
    input_size = 32
    batch = 8

    key = jax.random.PRNGKey(0)
    kp, kx, ky = jax.random.split(key, 3)

    params = init_params(kp, input_size)
    x = jax.random.normal(kx, (batch, input_size), jnp.float32)
    y = jax.random.randint(ky, (batch,), 0, NUM_CLASSES, jnp.int32)

    # inference path (y=None) -> (batch, 5) logits
    logits = torch_model_forward(x, params, y=None)
    jax.block_until_ready(logits)

    # training path (y given) -> scalar mean cross-entropy loss
    loss = torch_model_forward(x, params, y=y)
    jax.block_until_ready(loss)

    # --- sanity checks -----------------------------------------------------
    w1, b1, w2, b2 = params

    # (a) same-arithmetic reference (bf16 matmul operands, f32 accumulation)
    xb, w1b, w2b = (t.astype(jnp.bfloat16) for t in (x, w1, w2))
    h_b = jnp.dot(xb, w1b.T, preferred_element_type=jnp.float32) + b1
    logits_b = jnp.dot(h_b.astype(jnp.bfloat16), w2b.T, preferred_element_type=jnp.float32) + b2
    logp_b = jax.nn.log_softmax(logits_b, axis=-1)
    loss_b = -jnp.mean(logp_b[jnp.arange(batch), y])
    # kernel logits went through a bf16 writeback -> allow bf16-rounding tolerance
    assert jnp.allclose(logits, logits_b, atol=3e-2), "logits mismatch vs bf16 reference"
    assert jnp.allclose(loss, loss_b, atol=1e-2), "loss mismatch vs bf16 reference"

    # (b) full-f32 PyTorch-semantics reference -> loose tolerance (bf16 matmul operands)
    logits_f = (x @ w1.T + b1) @ w2.T + b2
    logp_f = jax.nn.log_softmax(logits_f, axis=-1)
    loss_f = -jnp.mean(logp_f[jnp.arange(batch), y])
    assert jnp.allclose(logits, logits_f, atol=2.5e-1), "logits far from f32 reference"
    assert jnp.allclose(loss, loss_f, atol=2.5e-1), "loss far from f32 reference"

    print("KERNEL_OK")
</pallas_src>

<mosaic_0001>
module attributes {stable_mosaic.version = 11 : i64} {
  func.func @_forward_kernel(%arg0: i32, %arg1: memref<16x32xf32, #tpu.memory_space<vmem>>, %arg2: memref<32x32xbf16, #tpu.memory_space<vmem>>, %arg3: memref<1x32xf32, #tpu.memory_space<vmem>>, %arg4: memref<32x128xbf16, #tpu.memory_space<vmem>>, %arg5: memref<1x128xf32, #tpu.memory_space<vmem>>, %arg6: memref<16x128xbf16, #tpu.memory_space<vmem>>) attributes {dimension_semantics = [#tpu.dimension_semantics<parallel>], iteration_bounds = array<i64: 1>, scalar_prefetch = 0 : i64, scratch_operands = 0 : i64, tpu.core_type = #tpu.core_type<tc>, window_params = [{transform_indices = @transform_0, window_bounds = array<i64: 16, 32>}, {pipeline_mode = #tpu.pipeline_mode<synchronous>, transform_indices = @transform_1, window_bounds = array<i64: 32, 32>}, {pipeline_mode = #tpu.pipeline_mode<synchronous>, transform_indices = @transform_2, window_bounds = array<i64: 1, 32>}, {pipeline_mode = #tpu.pipeline_mode<synchronous>, transform_indices = @transform_3, window_bounds = array<i64: 32, 128>}, {pipeline_mode = #tpu.pipeline_mode<synchronous>, transform_indices = @transform_4, window_bounds = array<i64: 1, 128>}, {transform_indices = @transform_5, window_bounds = array<i64: 16, 128>}]} {
    %c0 = arith.constant 0 : index
    %c0_0 = arith.constant 0 : index
    %0 = vector.load %arg1[%c0, %c0_0] : memref<16x32xf32, #tpu.memory_space<vmem>>, vector<16x32xf32>
    %1 = arith.truncf %0 : vector<16x32xf32> to vector<16x32xbf16>
    %c0_1 = arith.constant 0 : index
    %c0_2 = arith.constant 0 : index
    %2 = vector.load %arg2[%c0_1, %c0_2] : memref<32x32xbf16, #tpu.memory_space<vmem>>, vector<32x32xbf16>
    %cst = arith.constant dense<0.000000e+00> : vector<16x32xf32>
    %3 = tpu.matmul %1, %2, %cst {dimension_numbers = #tpu.dot_dimension_numbers<[1], [0], [0], [1], [0, 0, 1, 1], [], []>} : vector<16x32xbf16>, vector<32x32xbf16>, vector<16x32xf32> -> vector<16x32xf32>
    %c0_3 = arith.constant 0 : index
    %c0_4 = arith.constant 0 : index
    %4 = vector.load %arg3[%c0_3, %c0_4] : memref<1x32xf32, #tpu.memory_space<vmem>>, vector<1x32xf32>
    %5 = vector.broadcast %4 : vector<1x32xf32> to vector<16x32xf32>
    %6 = arith.addf %3, %5 : vector<16x32xf32>
    %7 = arith.truncf %6 : vector<16x32xf32> to vector<16x32xbf16>
    %c0_5 = arith.constant 0 : index
    %c0_6 = arith.constant 0 : index
    %8 = vector.load %arg4[%c0_5, %c0_6] : memref<32x128xbf16, #tpu.memory_space<vmem>>, vector<32x128xbf16>
    %cst_7 = arith.constant dense<0.000000e+00> : vector<16x128xf32>
    %9 = tpu.matmul %7, %8, %cst_7 {dimension_numbers = #tpu.dot_dimension_numbers<[1], [0], [0], [1], [0, 0, 1, 1], [], []>} : vector<16x32xbf16>, vector<32x128xbf16>, vector<16x128xf32> -> vector<16x128xf32>
    %c0_8 = arith.constant 0 : index
    %c0_9 = arith.constant 0 : index
    %10 = vector.load %arg5[%c0_8, %c0_9] : memref<1x128xf32, #tpu.memory_space<vmem>>, vector<1x128xf32>
    %11 = vector.broadcast %10 : vector<1x128xf32> to vector<16x128xf32>
    %12 = arith.addf %9, %11 : vector<16x128xf32>
    %13 = arith.truncf %12 : vector<16x128xf32> to vector<16x128xbf16>
    %c0_10 = arith.constant 0 : index
    %c0_11 = arith.constant 0 : index
    %14 = vector.load %arg6[%c0_10, %c0_11] : memref<16x128xbf16, #tpu.memory_space<vmem>>, vector<16x128xbf16>
    tpu.vector_store %arg6[%c0_10, %c0_11], %13 {strides = array<i32>} : memref<16x128xbf16, #tpu.memory_space<vmem>>, vector<16x128xbf16>,
    return
  }
  func.func @transform_0(%arg0: i32) -> (i32, i32) {
    %c0_i32 = arith.constant 0 : i32
    %c0_i32_0 = arith.constant 0 : i32
    return %arg0, %c0_i32 : i32, i32
  }
  func.func @transform_1(%arg0: i32) -> (i32, i32) {
    %c0_i32 = arith.constant 0 : i32
    %c0_i32_0 = arith.constant 0 : i32
    %c0_i32_1 = arith.constant 0 : i32
    return %c0_i32, %c0_i32_0 : i32, i32
  }
  func.func @transform_2(%arg0: i32) -> (i32, i32) {
    %c0_i32 = arith.constant 0 : i32
    %c0_i32_0 = arith.constant 0 : i32
    %c0_i32_1 = arith.constant 0 : i32
    return %c0_i32, %c0_i32_0 : i32, i32
  }
  func.func @transform_3(%arg0: i32) -> (i32, i32) {
    %c0_i32 = arith.constant 0 : i32
    %c0_i32_0 = arith.constant 0 : i32
    %c0_i32_1 = arith.constant 0 : i32
    return %c0_i32, %c0_i32_0 : i32, i32
  }
  func.func @transform_4(%arg0: i32) -> (i32, i32) {
    %c0_i32 = arith.constant 0 : i32
    %c0_i32_0 = arith.constant 0 : i32
    %c0_i32_1 = arith.constant 0 : i32
    return %c0_i32, %c0_i32_0 : i32, i32
  }
  func.func @transform_5(%arg0: i32) -> (i32, i32) {
    %c0_i32 = arith.constant 0 : i32
    %c0_i32_0 = arith.constant 0 : i32
    return %arg0, %c0_i32 : i32, i32
  }
}

</mosaic_0001>

<llo_original>
// kernel: tpu_custom_call.1
$region0: #{tpu_custom_call.1}
  #allocation0 [shape = 'u32[]', space=smem, size = 0x4, offset = 0x4, fixed_abs, tag = 'smem constant byte address 0x4 - core index']
  #allocation1 [shape = 'u32[144,128]{1,0:T(1,128)}', space=vmem, size = 0x12000, scoped, tag = 'internal scratch']
  %s0 = inlined_call_operand.hbm [shape: f32[16,32], index: 0, kind: input, shape index: {}]
  %s1 = inlined_call_operand.hbm [shape: bf16[32,32], index: 1, kind: input, shape index: {}]
  %s2 = inlined_call_operand.vmem [shape: f32[1,32], index: 2, kind: input, shape index: {}]
  %s3 = inlined_call_operand.hbm [shape: bf16[32,128], index: 3, kind: input, shape index: {}]
  %s4 = inlined_call_operand.vmem [shape: f32[1,128], index: 4, kind: input, shape index: {}]
  %s5 = inlined_call_operand.hbm [shape: bf16[16,128], index: 5, kind: output, shape index: {}]
  %s6 = sld [smem:[#allocation0]]
  $region42: #{tpu_custom_call.1} parent=0
    _
  %s8 = ssub.s32 1, %s6
  %s9 = scalar_select 0, %s8, %s6
  $region1: #{tpu_custom_call.1} parent=0
    #allocation2 [shape = 'u8[8192]{0}', space=vmem, size = 0x2000, scoped, tag = 'input window, operand 0, single buffered']
    #allocation3 [shape = 's32[1]{0}', space=sflag, size = 0x4, scoped, tag = 'scoped memory for tpu_custom_call.1']
    #allocation4 [shape = 's32[1]{0}', space=sflag, size = 0x4, scoped, tag = 'scoped memory for tpu_custom_call.1']
    #allocation5 [shape = 'u8[8192]{0}', space=vmem, size = 0x2000, scoped, tag = 'input window, operand 1, single buffered']
    #allocation6 [shape = 's32[1]{0}', space=sflag, size = 0x4, scoped, tag = 'scoped memory for tpu_custom_call.1']
    #allocation7 [shape = 'u8[8192]{0}', space=vmem, size = 0x2000, scoped, tag = 'input window, operand 3, single buffered']
    #allocation8 [shape = 'u8[4096]{0}', space=vmem, size = 0x1000, scoped, tag = 'output window, operand 0, single buffered']
    %10 = vsyncpa [#allocation3], 0
    %11 = vsyncpa [#allocation6], 0
    %12 = vsyncpa [#allocation4], 0
    // Predicated region
    $region2: #{tpu_custom_call.1} parent=1 // pred_check
      _
    $region3: #{tpu_custom_call.1} parent=1 // pred_check_branch
      %14 = sbr.rel (0) target = $region5
    $region4: #{tpu_custom_call.1} parent=1 // pred_region
      %s16 = ssub.s32 256, 256
      %17 = vsyncadd [#allocation3], %s16
      %s18 = sshll.u32 [#allocation2], 4
      %s19 = int_to_ptr.vmem [resolvable:$true] %s18
      %24 = dma.hbm_to_vmem [thread:$0]  %s0, 256, %s19, [#allocation3], 128, 128, 8
    $region5: #{tpu_custom_call.1} parent=1 // pred_fallthru
      _
    // Predicated region
    $region6: #{tpu_custom_call.1} parent=1 // pred_check
      _
    $region7: #{tpu_custom_call.1} parent=1 // pred_check_branch
      %26 = sbr.rel (0) target = $region9
    $region8: #{tpu_custom_call.1} parent=1 // pred_region
      %s28 = ssub.s32 256, 256
      %29 = vsyncadd [#allocation6], %s28
      %s30 = sshll.u32 [#allocation5], 4
      %s31 = int_to_ptr.vmem [resolvable:$true] %s30
      %36 = dma.hbm_to_vmem [thread:$0]  %s1, 256, %s31, [#allocation6], 64, 64, 4
    $region9: #{tpu_custom_call.1} parent=1 // pred_fallthru
      _
    // Predicated region
    $region10: #{tpu_custom_call.1} parent=1 // pred_check
      _
    $region11: #{tpu_custom_call.1} parent=1 // pred_check_branch
      %38 = sbr.rel (0) target = $region13
    $region12: #{tpu_custom_call.1} parent=1 // pred_region
      _
    $region13: #{tpu_custom_call.1} parent=1 // pred_fallthru
      _
    // Predicated region
    $region14: #{tpu_custom_call.1} parent=1 // pred_check
      _
    $region15: #{tpu_custom_call.1} parent=1 // pred_check_branch
      %40 = sbr.rel (0) target = $region17
    $region16: #{tpu_custom_call.1} parent=1 // pred_region
      %s42 = ssub.s32 256, 256
      %43 = vsyncadd [#allocation6], %s42
      %s44 = sshll.u32 [#allocation7], 4
      %s45 = int_to_ptr.vmem [resolvable:$true] %s44
      %50 = dma.hbm_to_vmem [thread:$0]  %s3, 256, %s45, [#allocation6], 64, 64, 4
    $region17: #{tpu_custom_call.1} parent=1 // pred_fallthru
      _
    // Predicated region
    $region18: #{tpu_custom_call.1} parent=1 // pred_check
      _
    $region19: #{tpu_custom_call.1} parent=1 // pred_check_branch
      %52 = sbr.rel (0) target = $region21
    $region20: #{tpu_custom_call.1} parent=1 // pred_region
      _
    $region21: #{tpu_custom_call.1} parent=1 // pred_fallthru
      _
    // Predicated region
    $region22: #{tpu_custom_call.1} parent=1 // pred_check
      _
    $region23: #{tpu_custom_call.1} parent=1 // pred_check_branch
      %54 = sbr.rel (0) target = $region25
    $region24: #{tpu_custom_call.1} parent=1 // pred_region
      %55 = dma.done [#allocation3], 256
    $region25: #{tpu_custom_call.1} parent=1 // pred_fallthru
      _
    // Predicated region
    $region26: #{tpu_custom_call.1} parent=1 // pred_check
      _
    $region27: #{tpu_custom_call.1} parent=1 // pred_check_branch
      %57 = sbr.rel (0) target = $region29
    $region28: #{tpu_custom_call.1} parent=1 // pred_region
      %58 = dma.done [#allocation6], 256
    $region29: #{tpu_custom_call.1} parent=1 // pred_fallthru
      _
    // Predicated region
    $region30: #{tpu_custom_call.1} parent=1 // pred_check
      _
    $region31: #{tpu_custom_call.1} parent=1 // pred_check_branch
      %60 = sbr.rel (0) target = $region33
    $region32: #{tpu_custom_call.1} parent=1 // pred_region
      %61 = dma.done [#allocation6], 256
    $region33: #{tpu_custom_call.1} parent=1 // pred_fallthru
      _
    %v63 = vld [vmem:[#allocation2] sm:$0xff]
    %v64 = vld [vmem:[#allocation2 + $0x8] sm:$0xff]
    %v65 = vpack.c.bf16 %v64, %v63
    %v66 = vld [vmem:[#allocation5] sm:$0xf]
    %v67 = vld [vmem:[#allocation5 + $0x4] sm:$0xf]
    %v68 = vld [vmem:[#allocation5 + $0x8] sm:$0xf]
    %v69 = vld [vmem:[#allocation5 + $0xc] sm:$0xf]
    %v70 = vld [vmem:[%s2] sm:$0x1]
    %v72 = vlaneseq
    %v73 = vshrl.u32 %v72, 7
    %v74 = vsub.s32 0, %v73
    %v75 = vrot.slane %v70, %v74
    %v81 = vunpack.c.l.b16 %v66
    %v82 = vunpack.c.l.b16 %v67
    %v83 = vunpack.c.l.b16 %v68
    %v84 = vunpack.c.l.b16 %v69
    %v85 = vpack.c.b16 %v82, %v81
    %v86 = vpack.c.b16 %v84, %v83
    %vm89 = vcmask 261120
    %v91 = vsel %vm89, %v65, 0
    %93 = vmatprep.subr.bf16.mxu0 0
    %94 = vmatpush1.bf16.msra.mxu0 %v85
    %95 = vmatprep.subr.bf16.mxu0 0
    %96 = vmatpush1.bf16.msra.mxu0 %v86
    %97 = vmatprep.subr.bf16.mxu0 0
    %98 = vmatpush1.bf16.msra.mxu0 0
    %99 = vmatprep.subr.bf16.mxu0 0
    %100 = vmatpush1.bf16.msra.mxu0 0
    %101 = vmatprep.subr.bf16.mxu0 0
    %102 = vmatpush1.bf16.msra.mxu0 0
    %103 = vmatprep.subr.bf16.mxu0 0
    %104 = vmatpush1.bf16.msra.mxu0 0
    %105 = vmatprep.subr.bf16.mxu0 0
    %106 = vmatpush1.bf16.msra.mxu0 0
    %107 = vmatprep.subr.bf16.mxu0 0
    %108 = vmatpush1.bf16.msra.mxu0 0
    %109 = vmatprep.subr.bf16.mxu0 0
    %110 = vmatpush1.bf16.msra.mxu0 0
    %111 = vmatprep.subr.bf16.mxu0 0
    %112 = vmatpush1.bf16.msra.mxu0 0
    %113 = vmatprep.subr.bf16.mxu0 0
    %114 = vmatpush1.bf16.msra.mxu0 0
    %115 = vmatprep.subr.bf16.mxu0 0
    %116 = vmatpush1.bf16.msra.mxu0 0
    %117 = vmatprep.subr.bf16.mxu0 0
    %118 = vmatpush1.bf16.msra.mxu0 0
    %119 = vmatprep.subr.bf16.mxu0 0
    %120 = vmatpush1.bf16.msra.mxu0 0
    %121 = vmatprep.subr.bf16.mxu0 0
    %122 = vmatpush1.bf16.msra.mxu0 0
    %123 = vmatprep.subr.bf16.mxu0 0
    %124 = vmatpush1.bf16.msra.mxu0 0
    %125 = vmatprep.mubr.bf16.mxu0 0
    %126 = vmatmul.mubr.bf16.gmra.mrb[0].mxu0 %v91
    %v127 = vpop.f32.mrb[0].mxu0
    %v128 = vadd.f32 %v75, %v127
    %v129 = vpop.f32.mrb[0].mxu0
    %v130 = vpop.f32.mrb[0].mxu0
    %v131 = vadd.f32 %v75, %v130
    %v132 = vpop.f32.mrb[0].mxu0
    %133 = vdwg.mxu0
    %v134 = vpack.c.bf16 %v131, %v128
    %v135 = vld [vmem:[#allocation7] sm:$0xf]
    %v136 = vld [vmem:[#allocation7 + $0x4] sm:$0xf]
    %v137 = vld [vmem:[#allocation7 + $0x8] sm:$0xf]
    %v138 = vld [vmem:[#allocation7 + $0xc] sm:$0xf]
    %v139 = vld [vmem:[%s4] sm:$0x1]
    %v141 = vlaneseq
    %v142 = vshrl.u32 %v141, 7
    %v143 = vsub.s32 0, %v142
    %v144 = vrot.slane %v139, %v143
    %v150 = vunpack.c.l.b16 %v135
    %v151 = vunpack.c.l.b16 %v136
    %v152 = vunpack.c.l.b16 %v137
    %v153 = vunpack.c.l.b16 %v138
    %v154 = vpack.c.b16 %v151, %v150
    %v155 = vpack.c.b16 %v153, %v152
    %v159 = vsel %vm89, %v134, 0
    %161 = vmatprep.subr.bf16.mxu0 0
    %162 = vmatpush1.bf16.msra.mxu0 %v154
    %163 = vmatprep.subr.bf16.mxu0 0
    %164 = vmatpush1.bf16.msra.mxu0 %v155
    %165 = vmatprep.subr.bf16.mxu0 0
    %166 = vmatpush1.bf16.msra.mxu0 0
    %167 = vmatprep.subr.bf16.mxu0 0
    %168 = vmatpush1.bf16.msra.mxu0 0
    %169 = vmatprep.subr.bf16.mxu0 0
    %170 = vmatpush1.bf16.msra.mxu0 0
    %171 = vmatprep.subr.bf16.mxu0 0
    %172 = vmatpush1.bf16.msra.mxu0 0
    %173 = vmatprep.subr.bf16.mxu0 0
    %174 = vmatpush1.bf16.msra.mxu0 0
    %175 = vmatprep.subr.bf16.mxu0 0
    %176 = vmatpush1.bf16.msra.mxu0 0
    %177 = vmatprep.subr.bf16.mxu0 0
    %178 = vmatpush1.bf16.msra.mxu0 0
    %179 = vmatprep.subr.bf16.mxu0 0
    %180 = vmatpush1.bf16.msra.mxu0 0
    %181 = vmatprep.subr.bf16.mxu0 0
    %182 = vmatpush1.bf16.msra.mxu0 0
    %183 = vmatprep.subr.bf16.mxu0 0
    %184 = vmatpush1.bf16.msra.mxu0 0
    %185 = vmatprep.subr.bf16.mxu0 0
    %186 = vmatpush1.bf16.msra.mxu0 0
    %187 = vmatprep.subr.bf16.mxu0 0
    %188 = vmatpush1.bf16.msra.mxu0 0
    %189 = vmatprep.subr.bf16.mxu0 0
    %190 = vmatpush1.bf16.msra.mxu0 0
    %191 = vmatprep.subr.bf16.mxu0 0
    %192 = vmatpush1.bf16.msra.mxu0 0
    %193 = vmatprep.mubr.bf16.mxu0 0
    %194 = vmatmul.mubr.bf16.gmra.mrb[0].mxu0 %v159
    %v195 = vpop.f32.mrb[0].mxu0
    %v196 = vadd.f32 %v144, %v195
    %v197 = vpop.f32.mrb[0].mxu0
    %v198 = vpop.f32.mrb[0].mxu0
    %v199 = vadd.f32 %v144, %v198
    %v200 = vpop.f32.mrb[0].mxu0
    %201 = vdwg.mxu0
    %v202 = vpack.c.bf16 %v199, %v196
    %v204 = vunpack.c.l.b16 %v202
    %v205 = vunpack.c.h.b16 %v202
    %v206 = vpack.c.b16 %v204, %v204
    %v207 = vpack.c.b16 %v205, %v205
    %210 = vst [vmem:[#allocation8] sm:$0xf] %v206
    %211 = vst [vmem:[#allocation8 + $0x4] sm:$0xf] %v207
    // Predicated region
    $region34: #{tpu_custom_call.1} parent=1 // pred_check
      _
    $region35: #{tpu_custom_call.1} parent=1 // pred_check_branch
      %213 = sbr.rel (0) target = $region37
    $region36: #{tpu_custom_call.1} parent=1 // pred_region
      %s215 = ssub.s32 128, 128
      %216 = vsyncadd [#allocation4], %s215
      %s217 = sshll.u32 [#allocation8], 4
      %s218 = int_to_ptr.vmem [resolvable:$true] %s217
      %223 = dma.vmem_to_hbm [thread:$0]  %s218, 128, %s5, [#allocation4], 64, 64, 4
    $region37: #{tpu_custom_call.1} parent=1 // pred_fallthru
      _
    // Predicated region
    $region38: #{tpu_custom_call.1} parent=1 // pred_check
      _
    $region39: #{tpu_custom_call.1} parent=1 // pred_check_branch
      %225 = sbr.rel (0) target = $region41
    $region40: #{tpu_custom_call.1} parent=1 // pred_region
      %226 = dma.done [#allocation4], 128
    $region41: #{tpu_custom_call.1} parent=1 // pred_fallthru
      _
    %227 = vsyncpa [#allocation3], 1
    %228 = vsyncpa [#allocation6], 1
    %229 = vsyncpa [#allocation4], 1

</llo_original>
